<compile_context>
chip_gen: v5e
topology: v5e:2x2
jax: 0.10.0
libtpu: 0.0.40
codegen_flags: <defaults>
</compile_context>

<pallas_src>
import numpy as np

import jax
import jax.numpy as jnp
from jax import lax
from jax.experimental import pallas as pl
from jax.experimental.pallas import tpu as pltpu

EPS = 1e-5


def _tap_masks(H, W):
    """(9, H*W) float32 halo masks, tap order (kh, kw) row-major."""
    hh, ww = np.meshgrid(np.arange(H), np.arange(W), indexing="ij")
    hh = hh.reshape(-1)
    ww = ww.reshape(-1)
    ms = []
    for dh in (-1, 0, 1):
        for dw in (-1, 0, 1):
            ms.append(((hh + dh >= 0) & (hh + dh < H) &
                       (ww + dw >= 0) & (ww + dw < W)).astype(np.float32))
    return jnp.asarray(np.stack(ms, axis=0))


def _pick_tb(batch):
    """Batch-block size: amortize per-step overhead but keep >=2 grid steps
    (pipelining / both v7x TensorCores) whenever possible."""
    for tb in (8, 4, 2):
        if batch % tb == 0 and batch // tb >= 2:
            return tb
    return 1


def _make_kernel(H, W):
    HW = H * W
    taps = [(dh, dw) for dh in (-1, 0, 1) for dw in (-1, 0, 1)]

    def kernel(x_ref, s1_ref, b1_ref, w1_ref, b2_ref, w2_ref, mask_ref, o_ref):
        # x_ref   : (TB, C, HW)   batch tile of NCHW images (spatial flattened)
        # s1/b1   : (C, 1)        folded BN1 scale / bias
        # w1_ref  : (IC, C)       1x1 conv weights with BN2 scale folded in
        # b2_ref  : (IC, 1)       folded BN2 bias
        # w2_ref  : (G, 9*IC)     3x3 conv weights, im2col layout
        # mask_ref: (9, HW)       halo masks for the nine taps
        # o_ref   : (TB, C+G, HW) fused concat output
        TB, C, _ = x_ref.shape
        IC = w1_ref.shape[0]

        # Hoisted loads / lane-broadcasts (kept out of the per-image loop).
        s1 = jnp.broadcast_to(s1_ref[...].astype(jnp.float32), (C, HW))
        b1 = jnp.broadcast_to(b1_ref[...].astype(jnp.float32), (C, HW))
        b2 = jnp.broadcast_to(b2_ref[...].astype(jnp.float32), (IC, HW))
        w1 = w1_ref[...]
        w2 = w2_ref[...]
        m = mask_ref[...]

        for b in range(TB):                          # static unroll
            x = x_ref[b].astype(jnp.float32)         # (C, HW)

            # BN1 + ReLU
            h1 = jnp.maximum(x * s1 + b1, 0.0)

            # conv1 (1x1) with BN2 folded in, + ReLU  -> (IC, HW)
            h2 = jnp.maximum(
                jnp.dot(w1, h1, preferred_element_type=jnp.float32) + b2, 0.0)

            # im2col: nine circular lane shifts + halo masks -> (9*IC, HW)
            cols = []
            for t, (dh, dw) in enumerate(taps):
                d = (dh * W + dw) % HW
                if d == 0:
                    sh = h2
                else:
                    # explicit circular roll along the lane axis:
                    # sh[:, l] = h2[:, (l + d) % HW]
                    sh = jnp.concatenate([h2[:, d:], h2[:, :d]], axis=1)
                cols.append(sh * m[t:t + 1, :])
            col = jnp.concatenate(cols, axis=0)      # (9*IC, HW)

            # conv2 (3x3, padding=1) as one K=9*IC matmul -> (G, HW)
            out = jnp.dot(w2, col, preferred_element_type=jnp.float32)

            # Fused channel concat: one lane-dense store of [x ; out].
            o_ref[b] = jnp.concatenate([x, out], axis=0).astype(o_ref.dtype)

    return kernel


def bottleneck_forward(x_nchw, params):
    """x_nchw: (B, C, H, W) float32.  Returns (B, C + growthRate, H, W)."""
    B, C, H, W = x_nchw.shape
    HW = H * W
    w1 = params["w1"]                       # (C, IC)
    w2 = params["w2"]                       # (3, 3, IC, G)
    IC = w1.shape[1]
    G = w2.shape[3]

    # Fold BN (inference form, running stats) into per-channel scale / bias.
    # TODO(synk): training-mode BatchNorm (batch statistics / stat updates) is
    # not implemented; inference form with running stats is used.
    def fold(gamma, beta, mean, var):
        scale = gamma / jnp.sqrt(var + EPS)
        return scale, beta - mean * scale

    s1, b1 = fold(params["g1"], params["be1"], params["m1"], params["v1"])
    s2, b2 = fold(params["g2"], params["be2"], params["m2"], params["v2"])

    s1c = s1.reshape(C, 1).astype(jnp.float32)
    b1c = b1.reshape(C, 1).astype(jnp.float32)
    # BN2 scale folded into the 1x1 conv output channels; only the bias remains.
    w1s = (s2[:, None] * jnp.transpose(w1)).astype(jnp.float32)      # (IC, C)
    b2c = b2.reshape(IC, 1).astype(jnp.float32)
    # 3x3 weights in im2col layout (G, 9*IC), tap-major rows.
    w2f = jnp.transpose(w2, (3, 0, 1, 2)).reshape(G, 9 * IC).astype(jnp.float32)

    masks = _tap_masks(H, W)                                         # (9, HW)

    x_flat = x_nchw.reshape(B, C, HW)        # free relabel of contiguous NCHW

    TB = _pick_tb(B)
    grid = (B // TB,)

    out = pl.pallas_call(
        _make_kernel(H, W),
        out_shape=jax.ShapeDtypeStruct((B, C + G, HW), x_nchw.dtype),
        grid=grid,
        in_specs=[
            pl.BlockSpec((TB, C, HW), lambda i: (i, 0, 0)),
            pl.BlockSpec((C, 1), lambda i: (0, 0)),
            pl.BlockSpec((C, 1), lambda i: (0, 0)),
            pl.BlockSpec((IC, C), lambda i: (0, 0)),
            pl.BlockSpec((IC, 1), lambda i: (0, 0)),
            pl.BlockSpec((G, 9 * IC), lambda i: (0, 0)),
            pl.BlockSpec((9, HW), lambda i: (0, 0)),
        ],
        out_specs=pl.BlockSpec((TB, C + G, HW), lambda i: (i, 0, 0)),
        compiler_params=pltpu.CompilerParams(
            dimension_semantics=("parallel",)),
    )(x_flat, s1c, b1c, w1s, b2c, w2f, masks)

    return out.reshape(B, C + G, H, W)


def bottleneck_reference(x_nchw, params):
    """Pure-JAX reference (lax.conv) for verification."""
    def bn(x, g, be, m, v):
        rs = lambda a: a[None, :, None, None]
        return (x - rs(m)) / jnp.sqrt(rs(v) + EPS) * rs(g) + rs(be)

    C = x_nchw.shape[1]
    IC = params["w1"].shape[1]
    G = params["w2"].shape[3]
    w1_oihw = jnp.transpose(params["w1"], (1, 0)).reshape(IC, C, 1, 1)
    w2_oihw = jnp.transpose(params["w2"], (3, 2, 0, 1))            # (G, IC, 3, 3)

    h = jax.nn.relu(bn(x_nchw, params["g1"], params["be1"],
                       params["m1"], params["v1"]))
    y = lax.conv_general_dilated(h, w1_oihw, (1, 1), "VALID",
                                 dimension_numbers=("NCHW", "OIHW", "NCHW"))
    h2 = jax.nn.relu(bn(y, params["g2"], params["be2"],
                        params["m2"], params["v2"]))
    out = lax.conv_general_dilated(h2, w2_oihw, (1, 1), ((1, 1), (1, 1)),
                                   dimension_numbers=("NCHW", "OIHW", "NCHW"))
    return jnp.concatenate([x_nchw, out], axis=1)


def init_params(key, nChannels, growthRate):
    interChannels = 4 * growthRate
    ks = jax.random.split(key, 10)
    p = {
        # conv1: PyTorch shape (interC, C, 1, 1); stored as (C, interC)
        "w1": 0.1 * jax.random.normal(ks[0], (nChannels, interChannels),
                                      jnp.float32),
        # conv2: PyTorch shape (G, interC, 3, 3); stored as (3, 3, interC, G)
        "w2": 0.1 * jax.random.normal(ks[1], (3, 3, interChannels, growthRate),
                                      jnp.float32),
        # BatchNorm2d(nChannels): gamma, beta, running_mean, running_var
        "g1": 1.0 + 0.1 * jax.random.normal(ks[2], (nChannels,), jnp.float32),
        "be1": 0.1 * jax.random.normal(ks[3], (nChannels,), jnp.float32),
        "m1": 0.1 * jax.random.normal(ks[4], (nChannels,), jnp.float32),
        "v1": 1.0 + 0.1 * jnp.abs(jax.random.normal(ks[5], (nChannels,),
                                                    jnp.float32)),
        # BatchNorm2d(interChannels)
        "g2": 1.0 + 0.1 * jax.random.normal(ks[6], (interChannels,),
                                            jnp.float32),
        "be2": 0.1 * jax.random.normal(ks[7], (interChannels,), jnp.float32),
        "m2": 0.1 * jax.random.normal(ks[8], (interChannels,), jnp.float32),
        "v2": 1.0 + 0.1 * jnp.abs(jax.random.normal(ks[9], (interChannels,),
                                                    jnp.float32)),
    }
    return p


if __name__ == "__main__":
    # Shapes consistent with the module: nChannels=4, growthRate=4,
    # interChannels=16, x: (B=2, C=4, H=16, W=16) -> output (2, 8, 16, 16).
    B, nChannels, H, W = 2, 4, 16, 16
    growthRate = 4

    key = jax.random.PRNGKey(0)
    kx, kp = jax.random.split(key)
    x = jax.random.normal(kx, (B, nChannels, H, W), jnp.float32)
    params = init_params(kp, nChannels, growthRate)

    fwd = jax.jit(bottleneck_forward)
    out = jax.block_until_ready(fwd(x, params))
    ref = jax.block_until_ready(bottleneck_reference(x, params))

    assert out.shape == (B, nChannels + growthRate, H, W), out.shape
    err = float(jnp.max(jnp.abs(out - ref)))
    assert jnp.allclose(out, ref, atol=1e-4, rtol=1e-4), err
    print("KERNEL_OK")
</pallas_src>

<mosaic_0001>
module attributes {stable_mosaic.version = 11 : i64} {
  func.func @kernel(%arg0: i32, %arg1: memref<1x4x256xf32, #tpu.memory_space<vmem>>, %arg2: memref<4x1xf32, #tpu.memory_space<vmem>>, %arg3: memref<4x1xf32, #tpu.memory_space<vmem>>, %arg4: memref<16x4xf32, #tpu.memory_space<vmem>>, %arg5: memref<16x1xf32, #tpu.memory_space<vmem>>, %arg6: memref<4x144xf32, #tpu.memory_space<vmem>>, %arg7: memref<9x256xf32, #tpu.memory_space<vmem>>, %arg8: memref<1x8x256xf32, #tpu.memory_space<vmem>>) attributes {dimension_semantics = [#tpu.dimension_semantics<parallel>], iteration_bounds = array<i64: 2>, scalar_prefetch = 0 : i64, scratch_operands = 0 : i64, tpu.core_type = #tpu.core_type<tc>, window_params = [{transform_indices = @transform_0, window_bounds = array<i64: 1, 4, 256>}, {pipeline_mode = #tpu.pipeline_mode<synchronous>, transform_indices = @transform_1, window_bounds = array<i64: 4, 1>}, {pipeline_mode = #tpu.pipeline_mode<synchronous>, transform_indices = @transform_2, window_bounds = array<i64: 4, 1>}, {pipeline_mode = #tpu.pipeline_mode<synchronous>, transform_indices = @transform_3, window_bounds = array<i64: 16, 4>}, {pipeline_mode = #tpu.pipeline_mode<synchronous>, transform_indices = @transform_4, window_bounds = array<i64: 16, 1>}, {pipeline_mode = #tpu.pipeline_mode<synchronous>, transform_indices = @transform_5, window_bounds = array<i64: 4, 144>}, {pipeline_mode = #tpu.pipeline_mode<synchronous>, transform_indices = @transform_6, window_bounds = array<i64: 9, 256>}, {transform_indices = @transform_7, window_bounds = array<i64: 1, 8, 256>}]} {
    %c0 = arith.constant 0 : index
    %c0_0 = arith.constant 0 : index
    %0 = vector.load %arg2[%c0, %c0_0] : memref<4x1xf32, #tpu.memory_space<vmem>>, vector<4x1xf32>
    %1 = vector.shape_cast %0 : vector<4x1xf32> to vector<4x1xf32>
    %2 = vector.broadcast %1 : vector<4x1xf32> to vector<4x256xf32>
    %c0_1 = arith.constant 0 : index
    %c0_2 = arith.constant 0 : index
    %3 = vector.load %arg3[%c0_1, %c0_2] : memref<4x1xf32, #tpu.memory_space<vmem>>, vector<4x1xf32>
    %4 = vector.shape_cast %3 : vector<4x1xf32> to vector<4x1xf32>
    %5 = vector.broadcast %4 : vector<4x1xf32> to vector<4x256xf32>
    %c0_3 = arith.constant 0 : index
    %c0_4 = arith.constant 0 : index
    %6 = vector.load %arg5[%c0_3, %c0_4] : memref<16x1xf32, #tpu.memory_space<vmem>>, vector<16x1xf32>
    %7 = vector.shape_cast %6 : vector<16x1xf32> to vector<16x1xf32>
    %8 = vector.broadcast %7 : vector<16x1xf32> to vector<16x256xf32>
    %c0_5 = arith.constant 0 : index
    %c0_6 = arith.constant 0 : index
    %9 = vector.load %arg4[%c0_5, %c0_6] : memref<16x4xf32, #tpu.memory_space<vmem>>, vector<16x4xf32>
    %c0_7 = arith.constant 0 : index
    %c0_8 = arith.constant 0 : index
    %10 = vector.load %arg6[%c0_7, %c0_8] : memref<4x144xf32, #tpu.memory_space<vmem>>, vector<4x144xf32>
    %c0_9 = arith.constant 0 : index
    %c0_10 = arith.constant 0 : index
    %11 = vector.load %arg7[%c0_9, %c0_10] : memref<9x256xf32, #tpu.memory_space<vmem>>, vector<9x256xf32>
    %c0_11 = arith.constant 0 : index
    %c0_12 = arith.constant 0 : index
    %c0_13 = arith.constant 0 : index
    %12 = vector.load %arg1[%c0_11, %c0_12, %c0_13] : memref<1x4x256xf32, #tpu.memory_space<vmem>>, vector<1x4x256xf32>
    %13 = vector.shape_cast %12 : vector<1x4x256xf32> to vector<4x256xf32>
    %14 = arith.mulf %13, %2 : vector<4x256xf32>
    %15 = arith.addf %14, %5 : vector<4x256xf32>
    %cst = arith.constant 0.000000e+00 : f32
    %16 = vector.broadcast %cst : f32 to vector<4x256xf32>
    %17 = arith.maximumf %15, %16 : vector<4x256xf32>
    %cst_14 = arith.constant dense<0.000000e+00> : vector<16x256xf32>
    %18 = tpu.matmul %9, %17, %cst_14 {dimension_numbers = #tpu.dot_dimension_numbers<[1], [0], [0], [1], [0, 0, 1, 1], [], []>} : vector<16x4xf32>, vector<4x256xf32>, vector<16x256xf32> -> vector<16x256xf32>
    %19 = arith.addf %18, %8 : vector<16x256xf32>
    %cst_15 = arith.constant 0.000000e+00 : f32
    %20 = vector.broadcast %cst_15 : f32 to vector<16x256xf32>
    %21 = arith.maximumf %19, %20 : vector<16x256xf32>
    %22 = vector.extract_strided_slice %21 {offsets = [0, 239], sizes = [16, 17], strides = [1, 1]} : vector<16x256xf32> to vector<16x17xf32>
    %23 = vector.extract_strided_slice %21 {offsets = [0, 0], sizes = [16, 239], strides = [1, 1]} : vector<16x256xf32> to vector<16x239xf32>
    %24 = tpu.concatenate %22, %23 in 1 : vector<16x17xf32>, vector<16x239xf32> -> vector<16x256xf32>
    %25 = vector.extract_strided_slice %11 {offsets = [0, 0], sizes = [1, 256], strides = [1, 1]} : vector<9x256xf32> to vector<1x256xf32>
    %26 = vector.broadcast %25 : vector<1x256xf32> to vector<16x256xf32>
    %27 = arith.mulf %24, %26 : vector<16x256xf32>
    %28 = vector.extract_strided_slice %21 {offsets = [0, 240], sizes = [16, 16], strides = [1, 1]} : vector<16x256xf32> to vector<16x16xf32>
    %29 = vector.extract_strided_slice %21 {offsets = [0, 0], sizes = [16, 240], strides = [1, 1]} : vector<16x256xf32> to vector<16x240xf32>
    %30 = tpu.concatenate %28, %29 in 1 : vector<16x16xf32>, vector<16x240xf32> -> vector<16x256xf32>
    %31 = vector.extract_strided_slice %11 {offsets = [1, 0], sizes = [1, 256], strides = [1, 1]} : vector<9x256xf32> to vector<1x256xf32>
    %32 = vector.broadcast %31 : vector<1x256xf32> to vector<16x256xf32>
    %33 = arith.mulf %30, %32 : vector<16x256xf32>
    %34 = vector.extract_strided_slice %21 {offsets = [0, 241], sizes = [16, 15], strides = [1, 1]} : vector<16x256xf32> to vector<16x15xf32>
    %35 = vector.extract_strided_slice %21 {offsets = [0, 0], sizes = [16, 241], strides = [1, 1]} : vector<16x256xf32> to vector<16x241xf32>
    %36 = tpu.concatenate %34, %35 in 1 : vector<16x15xf32>, vector<16x241xf32> -> vector<16x256xf32>
    %37 = vector.extract_strided_slice %11 {offsets = [2, 0], sizes = [1, 256], strides = [1, 1]} : vector<9x256xf32> to vector<1x256xf32>
    %38 = vector.broadcast %37 : vector<1x256xf32> to vector<16x256xf32>
    %39 = arith.mulf %36, %38 : vector<16x256xf32>
    %40 = vector.extract_strided_slice %21 {offsets = [0, 255], sizes = [16, 1], strides = [1, 1]} : vector<16x256xf32> to vector<16x1xf32>
    %41 = vector.extract_strided_slice %21 {offsets = [0, 0], sizes = [16, 255], strides = [1, 1]} : vector<16x256xf32> to vector<16x255xf32>
    %42 = tpu.concatenate %40, %41 in 1 : vector<16x1xf32>, vector<16x255xf32> -> vector<16x256xf32>
    %43 = vector.extract_strided_slice %11 {offsets = [3, 0], sizes = [1, 256], strides = [1, 1]} : vector<9x256xf32> to vector<1x256xf32>
    %44 = vector.broadcast %43 : vector<1x256xf32> to vector<16x256xf32>
    %45 = arith.mulf %42, %44 : vector<16x256xf32>
    %46 = vector.extract_strided_slice %11 {offsets = [4, 0], sizes = [1, 256], strides = [1, 1]} : vector<9x256xf32> to vector<1x256xf32>
    %47 = vector.broadcast %46 : vector<1x256xf32> to vector<16x256xf32>
    %48 = arith.mulf %21, %47 : vector<16x256xf32>
    %49 = vector.extract_strided_slice %21 {offsets = [0, 1], sizes = [16, 255], strides = [1, 1]} : vector<16x256xf32> to vector<16x255xf32>
    %50 = vector.extract_strided_slice %21 {offsets = [0, 0], sizes = [16, 1], strides = [1, 1]} : vector<16x256xf32> to vector<16x1xf32>
    %51 = tpu.concatenate %49, %50 in 1 : vector<16x255xf32>, vector<16x1xf32> -> vector<16x256xf32>
    %52 = vector.extract_strided_slice %11 {offsets = [5, 0], sizes = [1, 256], strides = [1, 1]} : vector<9x256xf32> to vector<1x256xf32>
    %53 = vector.broadcast %52 : vector<1x256xf32> to vector<16x256xf32>
    %54 = arith.mulf %51, %53 : vector<16x256xf32>
    %55 = vector.extract_strided_slice %21 {offsets = [0, 15], sizes = [16, 241], strides = [1, 1]} : vector<16x256xf32> to vector<16x241xf32>
    %56 = vector.extract_strided_slice %21 {offsets = [0, 0], sizes = [16, 15], strides = [1, 1]} : vector<16x256xf32> to vector<16x15xf32>
    %57 = tpu.concatenate %55, %56 in 1 : vector<16x241xf32>, vector<16x15xf32> -> vector<16x256xf32>
    %58 = vector.extract_strided_slice %11 {offsets = [6, 0], sizes = [1, 256], strides = [1, 1]} : vector<9x256xf32> to vector<1x256xf32>
    %59 = vector.broadcast %58 : vector<1x256xf32> to vector<16x256xf32>
    %60 = arith.mulf %57, %59 : vector<16x256xf32>
    %61 = vector.extract_strided_slice %21 {offsets = [0, 16], sizes = [16, 240], strides = [1, 1]} : vector<16x256xf32> to vector<16x240xf32>
    %62 = vector.extract_strided_slice %21 {offsets = [0, 0], sizes = [16, 16], strides = [1, 1]} : vector<16x256xf32> to vector<16x16xf32>
    %63 = tpu.concatenate %61, %62 in 1 : vector<16x240xf32>, vector<16x16xf32> -> vector<16x256xf32>
    %64 = vector.extract_strided_slice %11 {offsets = [7, 0], sizes = [1, 256], strides = [1, 1]} : vector<9x256xf32> to vector<1x256xf32>
    %65 = vector.broadcast %64 : vector<1x256xf32> to vector<16x256xf32>
    %66 = arith.mulf %63, %65 : vector<16x256xf32>
    %67 = vector.extract_strided_slice %21 {offsets = [0, 17], sizes = [16, 239], strides = [1, 1]} : vector<16x256xf32> to vector<16x239xf32>
    %68 = vector.extract_strided_slice %21 {offsets = [0, 0], sizes = [16, 17], strides = [1, 1]} : vector<16x256xf32> to vector<16x17xf32>
    %69 = tpu.concatenate %67, %68 in 1 : vector<16x239xf32>, vector<16x17xf32> -> vector<16x256xf32>
    %70 = vector.extract_strided_slice %11 {offsets = [8, 0], sizes = [1, 256], strides = [1, 1]} : vector<9x256xf32> to vector<1x256xf32>
    %71 = vector.broadcast %70 : vector<1x256xf32> to vector<16x256xf32>
    %72 = arith.mulf %69, %71 : vector<16x256xf32>
    %73 = tpu.concatenate %27, %33, %39, %45, %48, %54, %60, %66, %72 in 0 : vector<16x256xf32>, vector<16x256xf32>, vector<16x256xf32>, vector<16x256xf32>, vector<16x256xf32>, vector<16x256xf32>, vector<16x256xf32>, vector<16x256xf32>, vector<16x256xf32> -> vector<144x256xf32>
    %cst_16 = arith.constant dense<0.000000e+00> : vector<4x256xf32>
    %74 = tpu.matmul %10, %73, %cst_16 {dimension_numbers = #tpu.dot_dimension_numbers<[1], [0], [0], [1], [0, 0, 1, 1], [], []>} : vector<4x144xf32>, vector<144x256xf32>, vector<4x256xf32> -> vector<4x256xf32>
    %75 = tpu.concatenate %13, %74 in 0 : vector<4x256xf32>, vector<4x256xf32> -> vector<8x256xf32>
    %c0_17 = arith.constant 0 : index
    %c0_18 = arith.constant 0 : index
    %c0_19 = arith.constant 0 : index
    %76 = vector.load %arg8[%c0_17, %c0_18, %c0_19] : memref<1x8x256xf32, #tpu.memory_space<vmem>>, vector<1x8x256xf32>
    %77 = vector.shape_cast %76 : vector<1x8x256xf32> to vector<8x256xf32>
    %78 = vector.shape_cast %75 : vector<8x256xf32> to vector<1x8x256xf32>
    tpu.vector_store %arg8[%c0_17, %c0_18, %c0_19], %78 {strides = array<i32>} : memref<1x8x256xf32, #tpu.memory_space<vmem>>, vector<1x8x256xf32>,
    return
  }
  func.func @transform_0(%arg0: i32) -> (i32, i32, i32) {
    %c0_i32 = arith.constant 0 : i32
    %c0_i32_0 = arith.constant 0 : i32
    %c0_i32_1 = arith.constant 0 : i32
    return %arg0, %c0_i32, %c0_i32_0 : i32, i32, i32
  }
  func.func @transform_1(%arg0: i32) -> (i32, i32) {
    %c0_i32 = arith.constant 0 : i32
    %c0_i32_0 = arith.constant 0 : i32
    %c0_i32_1 = arith.constant 0 : i32
    return %c0_i32, %c0_i32_0 : i32, i32
  }
  func.func @transform_2(%arg0: i32) -> (i32, i32) {
    %c0_i32 = arith.constant 0 : i32
    %c0_i32_0 = arith.constant 0 : i32
    %c0_i32_1 = arith.constant 0 : i32
    return %c0_i32, %c0_i32_0 : i32, i32
  }
  func.func @transform_3(%arg0: i32) -> (i32, i32) {
    %c0_i32 = arith.constant 0 : i32
    %c0_i32_0 = arith.constant 0 : i32
    %c0_i32_1 = arith.constant 0 : i32
    return %c0_i32, %c0_i32_0 : i32, i32
  }
  func.func @transform_4(%arg0: i32) -> (i32, i32) {
    %c0_i32 = arith.constant 0 : i32
    %c0_i32_0 = arith.constant 0 : i32
    %c0_i32_1 = arith.constant 0 : i32
    return %c0_i32, %c0_i32_0 : i32, i32
  }
  func.func @transform_5(%arg0: i32) -> (i32, i32) {
    %c0_i32 = arith.constant 0 : i32
    %c0_i32_0 = arith.constant 0 : i32
    %c0_i32_1 = arith.constant 0 : i32
    return %c0_i32, %c0_i32_0 : i32, i32
  }
  func.func @transform_6(%arg0: i32) -> (i32, i32) {
    %c0_i32 = arith.constant 0 : i32
    %c0_i32_0 = arith.constant 0 : i32
    %c0_i32_1 = arith.constant 0 : i32
    return %c0_i32, %c0_i32_0 : i32, i32
  }
  func.func @transform_7(%arg0: i32) -> (i32, i32, i32) {
    %c0_i32 = arith.constant 0 : i32
    %c0_i32_0 = arith.constant 0 : i32
    %c0_i32_1 = arith.constant 0 : i32
    return %arg0, %c0_i32, %c0_i32_0 : i32, i32, i32
  }
}

</mosaic_0001>

<llo_original>
// kernel: bottleneck_forward.1
$region0: #{bottleneck_forward.1}
  #allocation0 [shape = 'u32[]', space=smem, size = 0x4, offset = 0x4, fixed_abs, tag = 'smem constant byte address 0x4 - core index']
  #allocation1 [shape = 'u32[72,128]{1,0:T(1,128)}', space=vmem, size = 0x9000, scoped, tag = 'internal scratch']
  %s0 = inlined_call_operand.vmem [shape: f32[2,4,256], index: 0, kind: input, shape index: {}]
  %s1 = inlined_call_operand.vmem [shape: f32[4,1], index: 1, kind: input, shape index: {}]
  %s2 = inlined_call_operand.vmem [shape: f32[4,1], index: 2, kind: input, shape index: {}]
  %s3 = inlined_call_operand.vmem [shape: f32[16,4], index: 3, kind: input, shape index: {}]
  %s4 = inlined_call_operand.vmem [shape: f32[16,1], index: 4, kind: input, shape index: {}]
  %s5 = inlined_call_operand.vmem [shape: f32[4,144], index: 5, kind: input, shape index: {}]
  %s6 = inlined_call_operand.vmem [shape: f32[9,256], index: 6, kind: input, shape index: {}]
  %s7 = inlined_call_operand.vmem [shape: f32[2,8,256], index: 7, kind: output, shape index: {}]
  %s8 = sld [smem:[#allocation0]]
  $region61: #{bottleneck_forward.1} parent=0
    _
  %s10 = ssub.s32 1, %s8
  %s11 = scalar_select 0, %s10, %s8
  loop: start=0, step=1, limit=4
  $region2: #{bottleneck_forward.1} parent=0 // loop_pre_header
    _
  $region3: #{bottleneck_forward.1} parent=0 // loop_header
    %s13 = sphi 0, %s17
    %p14 = scmp.ge.s32.totalorder %s13, 4
    %s23 = sphi 0, %s25
    %s26 = sphi 0, %s23
    %s27 = sphi 0, %s26
    %s43 = sphi 0, %s27
    %s47 = sphi 0, %s47
    %s49 = sphi 0, %s47
    %s50 = sphi 0, %s49
    %s64 = sphi 0, %s50
    %s68 = sphi 0, %s68
    %s70 = sphi 0, %s68
    %s71 = sphi 0, %s70
    %s85 = sphi 0, %s71
    %s89 = sphi 0, %s89
    %s91 = sphi 0, %s89
    %s92 = sphi 0, %s91
    %s106 = sphi 0, %s92
    %s110 = sphi 0, %s110
    %s112 = sphi 0, %s110
    %s113 = sphi 0, %s112
    %s127 = sphi 0, %s113
    %s131 = sphi 0, %s131
    %s133 = sphi 0, %s131
    %s134 = sphi 0, %s133
    %s148 = sphi 0, %s134
    %s152 = sphi 0, %s152
    %s154 = sphi 0, %s152
    %s155 = sphi 0, %s154
    %s169 = sphi 0, %s155
    %s175 = sphi 0, %s177
    %s178 = sphi 0, %s175
    %s179 = sphi 0, %s178
    %s195 = sphi 0, %s179
  $region4: #{bottleneck_forward.1} parent=0 // loop_header_branch
    %16 = sbr.rel (%p14) target = $region8
  $region5: #{bottleneck_forward.1} parent=0 // loop_body
    %s18 = ssub.s32 %s13, 1
    %s19 = ssub.s32 %s13, 2
    %s20 = sadd.s32 %s13, 1
    %s21 = ssub.s32 %s13, %s20
    %p22 = scmp.eq.s32.totalorder %s21, 0
    %s24 = sadd.s32 %s23, 1
    %s25 = scalar_select %p22, %s23, %s24
    %p28 = pneg %p22
    %p29 = scmp.eq.s32.totalorder %s13, 1
    %p30 = por %p28, %p29
    %p31 = scmp.ne.s32.totalorder %s23, %s26
    %p32 = scmp.eq.s32.totalorder %s13, 0
    %p33 = por %p31, %p32
    %p34 = scmp.ne.s32.totalorder %s23, %s26
    %p35 = scmp.eq.s32.totalorder %s18, 1
    %p36 = por %p34, %p35
    %p37 = scmp.ne.s32.totalorder %s26, %s27
    %p38 = scmp.eq.s32.totalorder %s18, 0
    %p39 = por %p37, %p38
    %p40 = scmp.ne.s32.totalorder %s26, %s27
    %p41 = scmp.eq.s32.totalorder %s19, 1
    %p42 = por %p40, %p41
    %p44 = scmp.ne.s32.totalorder %s27, %s43
    %p45 = scmp.eq.s32.totalorder %s19, 0
    %p46 = por %p44, %p45
    %s48 = sadd.s32 %s47, 1
    %p51 = scmp.eq.s32.totalorder %s13, 1
    %p52 = scmp.ne.s32.totalorder %s47, %s49
    %p53 = scmp.eq.s32.totalorder %s13, 0
    %p54 = por %p52, %p53
    %p55 = scmp.ne.s32.totalorder %s47, %s49
    %p56 = scmp.eq.s32.totalorder %s18, 1
    %p57 = por %p55, %p56
    %p58 = scmp.ne.s32.totalorder %s49, %s50
    %p59 = scmp.eq.s32.totalorder %s18, 0
    %p60 = por %p58, %p59
    %p61 = scmp.ne.s32.totalorder %s49, %s50
    %p62 = scmp.eq.s32.totalorder %s19, 1
    %p63 = por %p61, %p62
    %p65 = scmp.ne.s32.totalorder %s50, %s64
    %p66 = scmp.eq.s32.totalorder %s19, 0
    %p67 = por %p65, %p66
    %s69 = sadd.s32 %s68, 1
    %p72 = scmp.eq.s32.totalorder %s13, 1
    %p73 = scmp.ne.s32.totalorder %s68, %s70
    %p74 = scmp.eq.s32.totalorder %s13, 0
    %p75 = por %p73, %p74
    %p76 = scmp.ne.s32.totalorder %s68, %s70
    %p77 = scmp.eq.s32.totalorder %s18, 1
    %p78 = por %p76, %p77
    %p79 = scmp.ne.s32.totalorder %s70, %s71
    %p80 = scmp.eq.s32.totalorder %s18, 0
    %p81 = por %p79, %p80
    %p82 = scmp.ne.s32.totalorder %s70, %s71
    %p83 = scmp.eq.s32.totalorder %s19, 1
    %p84 = por %p82, %p83
    %p86 = scmp.ne.s32.totalorder %s71, %s85
    %p87 = scmp.eq.s32.totalorder %s19, 0
    %p88 = por %p86, %p87
    %s90 = sadd.s32 %s89, 1
    %p93 = scmp.eq.s32.totalorder %s13, 1
    %p94 = scmp.ne.s32.totalorder %s89, %s91
    %p95 = scmp.eq.s32.totalorder %s13, 0
    %p96 = por %p94, %p95
    %p97 = scmp.ne.s32.totalorder %s89, %s91
    %p98 = scmp.eq.s32.totalorder %s18, 1
    %p99 = por %p97, %p98
    %p100 = scmp.ne.s32.totalorder %s91, %s92
    %p101 = scmp.eq.s32.totalorder %s18, 0
    %p102 = por %p100, %p101
    %p103 = scmp.ne.s32.totalorder %s91, %s92
    %p104 = scmp.eq.s32.totalorder %s19, 1
    %p105 = por %p103, %p104
    %p107 = scmp.ne.s32.totalorder %s92, %s106
    %p108 = scmp.eq.s32.totalorder %s19, 0
    %p109 = por %p107, %p108
    %s111 = sadd.s32 %s110, 1
    %p114 = scmp.eq.s32.totalorder %s13, 1
    %p115 = scmp.ne.s32.totalorder %s110, %s112
    %p116 = scmp.eq.s32.totalorder %s13, 0
    %p117 = por %p115, %p116
    %p118 = scmp.ne.s32.totalorder %s110, %s112
    %p119 = scmp.eq.s32.totalorder %s18, 1
    %p120 = por %p118, %p119
    %p121 = scmp.ne.s32.totalorder %s112, %s113
    %p122 = scmp.eq.s32.totalorder %s18, 0
    %p123 = por %p121, %p122
    %p124 = scmp.ne.s32.totalorder %s112, %s113
    %p125 = scmp.eq.s32.totalorder %s19, 1
    %p126 = por %p124, %p125
    %p128 = scmp.ne.s32.totalorder %s113, %s127
    %p129 = scmp.eq.s32.totalorder %s19, 0
    %p130 = por %p128, %p129
    %s132 = sadd.s32 %s131, 1
    %p135 = scmp.eq.s32.totalorder %s13, 1
    %p136 = scmp.ne.s32.totalorder %s131, %s133
    %p137 = scmp.eq.s32.totalorder %s13, 0
    %p138 = por %p136, %p137
    %p139 = scmp.ne.s32.totalorder %s131, %s133
    %p140 = scmp.eq.s32.totalorder %s18, 1
    %p141 = por %p139, %p140
    %p142 = scmp.ne.s32.totalorder %s133, %s134
    %p143 = scmp.eq.s32.totalorder %s18, 0
    %p144 = por %p142, %p143
    %p145 = scmp.ne.s32.totalorder %s133, %s134
    %p146 = scmp.eq.s32.totalorder %s19, 1
    %p147 = por %p145, %p146
    %p149 = scmp.ne.s32.totalorder %s134, %s148
    %p150 = scmp.eq.s32.totalorder %s19, 0
    %p151 = por %p149, %p150
    %s153 = sadd.s32 %s152, 1
    %p156 = scmp.eq.s32.totalorder %s13, 1
    %p157 = scmp.ne.s32.totalorder %s152, %s154
    %p158 = scmp.eq.s32.totalorder %s13, 0
    %p159 = por %p157, %p158
    %p160 = scmp.ne.s32.totalorder %s152, %s154
    %p161 = scmp.eq.s32.totalorder %s18, 1
    %p162 = por %p160, %p161
    %p163 = scmp.ne.s32.totalorder %s154, %s155
    %p164 = scmp.eq.s32.totalorder %s18, 0
    %p165 = por %p163, %p164
    %p166 = scmp.ne.s32.totalorder %s154, %s155
    %p167 = scmp.eq.s32.totalorder %s19, 1
    %p168 = por %p166, %p167
    %p170 = scmp.ne.s32.totalorder %s155, %s169
    %p171 = scmp.eq.s32.totalorder %s19, 0
    %p172 = por %p170, %p171
    %s173 = ssub.s32 %s13, %s20
    %p174 = scmp.eq.s32.totalorder %s173, 0
    %s176 = sadd.s32 %s175, 1
    %s177 = scalar_select %p174, %s175, %s176
    %p180 = pneg %p174
    %p181 = scmp.eq.s32.totalorder %s13, 1
    %p182 = por %p180, %p181
    %p183 = scmp.ne.s32.totalorder %s175, %s178
    %p184 = scmp.eq.s32.totalorder %s13, 0
    %p185 = por %p183, %p184
    %p186 = scmp.ne.s32.totalorder %s175, %s178
    %p187 = scmp.eq.s32.totalorder %s18, 1
    %p188 = por %p186, %p187
    %p189 = scmp.ne.s32.totalorder %s178, %s179
    %p190 = scmp.eq.s32.totalorder %s18, 0
    %p191 = por %p189, %p190
    %p192 = scmp.ne.s32.totalorder %s178, %s179
    %p193 = scmp.eq.s32.totalorder %s19, 1
    %p194 = por %p192, %p193
    %p196 = scmp.ne.s32.totalorder %s179, %s195
    %p197 = scmp.eq.s32.totalorder %s19, 0
    %p198 = por %p196, %p197
    %p199 = scmp.le.s32.totalorder 1, %s13
    %p200 = scmp.lt.s32.totalorder %s13, 3
    %p201 = pnand %p199, %p200
    %p202 = pneg %p201
    // Predicated region
    $region9: #{bottleneck_forward.1} parent=5 // pred_check
      _
    $region10: #{bottleneck_forward.1} parent=5 // pred_check_branch
      %204 = sbr.rel (%p201) target = $region12
    $region11: #{bottleneck_forward.1} parent=5 // pred_region
      %s205 = ssub.s32 %s13, 1
      // Predicated region
      $region13: #{bottleneck_forward.1} parent=11 // pred_check
        %p206 = pneg %p60
      $region14: #{bottleneck_forward.1} parent=11 // pred_check_branch
        %208 = sbr.rel (%p206) target = $region16
      $region15: #{bottleneck_forward.1} parent=11 // pred_region
        _
      $region16: #{bottleneck_forward.1} parent=11 // pred_fallthru
        _
      // Predicated region
      $region17: #{bottleneck_forward.1} parent=11 // pred_check
        %p209 = pneg %p81
      $region18: #{bottleneck_forward.1} parent=11 // pred_check_branch
        %211 = sbr.rel (%p209) target = $region20
      $region19: #{bottleneck_forward.1} parent=11 // pred_region
        _
      $region20: #{bottleneck_forward.1} parent=11 // pred_fallthru
        _
      // Predicated region
      $region21: #{bottleneck_forward.1} parent=11 // pred_check
        %p212 = pneg %p102
      $region22: #{bottleneck_forward.1} parent=11 // pred_check_branch
        %214 = sbr.rel (%p212) target = $region24
      $region23: #{bottleneck_forward.1} parent=11 // pred_region
        _
      $region24: #{bottleneck_forward.1} parent=11 // pred_fallthru
        _
      // Predicated region
      $region25: #{bottleneck_forward.1} parent=11 // pred_check
        %p215 = pneg %p123
      $region26: #{bottleneck_forward.1} parent=11 // pred_check_branch
        %217 = sbr.rel (%p215) target = $region28
      $region27: #{bottleneck_forward.1} parent=11 // pred_region
        _
      $region28: #{bottleneck_forward.1} parent=11 // pred_fallthru
        _
      // Predicated region
      $region29: #{bottleneck_forward.1} parent=11 // pred_check
        %p218 = pneg %p144
      $region30: #{bottleneck_forward.1} parent=11 // pred_check_branch
        %220 = sbr.rel (%p218) target = $region32
      $region31: #{bottleneck_forward.1} parent=11 // pred_region
        _
      $region32: #{bottleneck_forward.1} parent=11 // pred_fallthru
        _
      // Predicated region
      $region33: #{bottleneck_forward.1} parent=11 // pred_check
        %p221 = pneg %p165
      $region34: #{bottleneck_forward.1} parent=11 // pred_check_branch
        %223 = sbr.rel (%p221) target = $region36
      $region35: #{bottleneck_forward.1} parent=11 // pred_region
        _
      $region36: #{bottleneck_forward.1} parent=11 // pred_fallthru
        _
    $region12: #{bottleneck_forward.1} parent=5 // pred_fallthru
      _
    %p224 = scmp.lt.s32.totalorder %s13, 2
    // Predicated region
    $region37: #{bottleneck_forward.1} parent=5 // pred_check
      %p225 = pneg %p224
    $region38: #{bottleneck_forward.1} parent=5 // pred_check_branch
      %227 = sbr.rel (%p225) target = $region40
    $region39: #{bottleneck_forward.1} parent=5 // pred_region
      // Predicated region
      $region41: #{bottleneck_forward.1} parent=39 // pred_check
        %p228 = pneg %p33
      $region42: #{bottleneck_forward.1} parent=39 // pred_check_branch
        %230 = sbr.rel (%p228) target = $region44
      $region43: #{bottleneck_forward.1} parent=39 // pred_region
        %p231 = scmp.lt.s32.totalorder %s13, 1
        %s232 = scalar_select %p231, %s13, 1
        %s233 = smul.addr %s232, 2
        %s234 = smul.addr %s233, 4
        %s235 = scalar_lea.vmem %s0, %s234
      $region44: #{bottleneck_forward.1} parent=39 // pred_fallthru
        _
    $region40: #{bottleneck_forward.1} parent=5 // pred_fallthru
      _
    %p236 = scmp.le.s32.totalorder 1, %s13
    %p237 = scmp.lt.s32.totalorder %s13, 3
    %p238 = pnand %p236, %p237
    %p239 = pneg %p238
    // Predicated region
    $region45: #{bottleneck_forward.1} parent=5 // pred_check
      _
    $region46: #{bottleneck_forward.1} parent=5 // pred_check_branch
      %241 = sbr.rel (%p238) target = $region48
    $region47: #{bottleneck_forward.1} parent=5 // pred_region
      %s242 = ssub.s32 %s13, 1
      %p243 = scmp.lt.s32.totalorder %s18, 1
      %s244 = scalar_select %p243, %s18, 1
      %s245 = smul.addr %s244, 2
      %s246 = smul.addr %s245, 4
      %s247 = scalar_lea.vmem %s0, %s246
      %p248 = pneg %p39
      %p249 = pneg %p36
      %p250 = pneg %p60
      %p251 = pneg %p57
      %p252 = pneg %p81
      %p253 = pneg %p78
      %p254 = pneg %p102
      %p255 = pneg %p99
      %p256 = pneg %p123
      %p257 = pneg %p120
      %p258 = pneg %p144
      %p259 = pneg %p141
      %p260 = pneg %p165
      %p261 = pneg %p162
      %p262 = pneg %p191
      %p263 = pneg %p188
      %p264 = scmp.lt.s32.totalorder %s18, 1
      %s265 = scalar_select %p264, %s18, 1
      %s266 = smul.addr %s265, 2
      %s267 = smul.addr %s266, 8
      %s268 = scalar_lea.vmem %s7, %s267
      %p269 = scmp.lt.s32.totalorder %s18, 1
      %s270 = scalar_select %p269, %s18, 1
      %s271 = smul.addr %s270, 2
      %s272 = smul.addr %s271, 4
      %s273 = scalar_lea.vmem %s0, %s272
      %p274 = scmp.lt.s32.totalorder %s18, 1
      %s275 = scalar_select %p274, %s18, 1
      %s276 = smul.addr %s275, 2
      %s277 = smul.addr %s276, 8
      %s278 = scalar_lea.vmem %s7, %s277
      %v279 = vld [vmem:[%s1] sm:$0xf]
      %281 = vset.pattern.permute.xlu0 0
      %282 = vperm.xlu0 %281, %v279
      %v283 = vpop.permute.xlu0 %282
      %v284 = vld [vmem:[%s2] sm:$0xf]
      %286 = vset.pattern.permute.xlu0 0
      %287 = vperm.xlu0 %286, %v284
      %v288 = vpop.permute.xlu0 %287
      %v289 = vld [vmem:[%s4] sm:$0xff]
      %v290 = vld [vmem:[%s4 + $0x8] sm:$0xff]
      %292 = vset.pattern.permute.xlu0 0
      %293 = vperm.xlu0 %292, %v289
      %v294 = vpop.permute.xlu0 %293
      %297 = vset.pattern.permute.xlu0 0
      %298 = vperm.xlu0 %297, %v290
      %v299 = vpop.permute.xlu0 %298
      %v301 = vld [vmem:[%s3] sm:$0xff]
      %v302 = vld [vmem:[%s3 + $0x8] sm:$0xff]
      %v303 = vld [vmem:[%s5] sm:$0xff]
      %v304 = vld [vmem:[%s6] sm:$0xff]
      %v305 = vld [vmem:[%s6 + $0x8] sm:$0xff]
      %v306 = vld [vmem:[%s6 + $0x10] sm:$0x1]
      %v307 = vld [vmem:[%s6 + $0x18] sm:$0x1]
      %v308 = vld [vmem:[%s273] sm:$0xff]
      %v310 = vunpack.c.l.s4 839922192
      %v311 = vunpack.c.0.s8 %v310
      %v312 = vperm.slane %v283, %v311
      %v314 = vmul.f32 %v308, %v312
      %v316 = vunpack.c.l.s4 839922192
      %v317 = vunpack.c.0.s8 %v316
      %v318 = vperm.slane %v288, %v317
      %v320 = vadd.f32 %v314, %v318
      %v321 = vmax.f32 %v320, 0.0
      %323 = vst [vmem:[#allocation1] ss:$2 sm:$0xff] %v321
      %v324 = vld.sshfl [vmem:[#allocation1] sm:$0xff pattern:$0x75316420]
      %v325 = vld.sshfl [vmem:[#allocation1 + $0x8] sm:$0xff pattern:$0x75316420]
      %vm326 = vcmask 31744
      %v328 = vsel %vm326, %v301, 0
      %v331 = vsel %vm326, %v302, 0
      %vm333 = vcmask 1043456
      %v334 = vsel %vm333, %v324, 0
      %v336 = vsel %vm333, %v325, 0
      %338 = vmatpush.msra.mxu0 0.0
      %339 = vmatpush.msra.mxu0 0.0
      %340 = vmatpush.msra.mxu0 0.0
      %341 = vmatpush.msra.mxu0 0.0
      %342 = vmatpush.msra.mxu0 0.0
      %343 = vmatpush.msra.mxu0 0.0
      %344 = vmatpush.msra.mxu0 0.0
      %345 = vmatpush.msra.mxu0 0.0
      %346 = vmatpush.msra.mxu0 0.0
      %347 = vmatpush.msra.mxu0 0.0
      %348 = vmatpush.msra.mxu0 0.0
      %349 = vmatpush.msra.mxu0 0.0
      %350 = vmatpush.msra.mxu0 0.0
      %351 = vmatpush.msra.mxu0 0.0
      %352 = vmatpush.msra.mxu0 0.0
      %353 = vmatpush.msra.mxu0 %v334
      %354 = vmatmul.f32.gmra.mxu0 %v328
      %v355 = vpop.f32.mrf.mxu0
      %v356 = vadd.f32 %v294, %v355
      %357 = vmatmul.f32.gmra.mxu0 %v331
      %v358 = vpop.f32.mrf.mxu0
      %v359 = vadd.f32 %v299, %v358
      %360 = vdwg.mxu0
      %361 = vmatpush.msra.mxu0 0.0
      %362 = vmatpush.msra.mxu0 0.0
      %363 = vmatpush.msra.mxu0 0.0
      %364 = vmatpush.msra.mxu0 0.0
      %365 = vmatpush.msra.mxu0 0.0
      %366 = vmatpush.msra.mxu0 0.0
      %367 = vmatpush.msra.mxu0 0.0
      %368 = vmatpush.msra.mxu0 0.0
      %369 = vmatpush.msra.mxu0 0.0
      %370 = vmatpush.msra.mxu0 0.0
      %371 = vmatpush.msra.mxu0 0.0
      %372 = vmatpush.msra.mxu0 0.0
      %373 = vmatpush.msra.mxu0 0.0
      %374 = vmatpush.msra.mxu0 0.0
      %375 = vmatpush.msra.mxu0 0.0
      %376 = vmatpush.msra.mxu0 %v336
      %377 = vmatmul.f32.gmra.mxu0 %v328
      %v378 = vpop.f32.mrf.mxu0
      %v379 = vadd.f32 %v294, %v378
      %380 = vmatmul.f32.gmra.mxu0 %v331
      %v381 = vpop.f32.mrf.mxu0
      %v382 = vadd.f32 %v299, %v381
      %383 = vdwg.mxu0
      %v384 = vmax.f32 %v356, 0.0
      %v385 = vmax.f32 %v379, 0.0
      %v386 = vmax.f32 %v359, 0.0
      %v387 = vmax.f32 %v382, 0.0
      %390 = vrot.lane.b32.xlu0 %v385, 17
      %v391 = vpop.permute.xlu0 %390
      %392 = vrot.lane.b32.xlu0 %v387, 17
      %v393 = vpop.permute.xlu0 %392
      %398 = vrot.lane.b32.xlu0 %v384, 17
      %v399 = vpop.permute.xlu0 %398
      %400 = vrot.lane.b32.xlu0 %v386, 17
      %v401 = vpop.permute.xlu0 %400
      %vm402 = vcmask 138240
      %v403 = vsel %vm402, %v399, %v391
      %v404 = vsel %vm402, %v401, %v393
      %v409 = vsel %vm402, %v391, %v399
      %v410 = vsel %vm402, %v393, %v401
      %v411 = vperm.slane %v304, 0
      %v412 = vperm.slane %v305, 0
      %v413 = vmul.f32 %v409, %v411
      %v414 = vmul.f32 %v403, %v412
      %v415 = vmul.f32 %v410, %v411
      %v416 = vmul.f32 %v404, %v412
      %417 = vrot.lane.b32.xlu0 %v385, 16
      %v418 = vpop.permute.xlu0 %417
      %419 = vrot.lane.b32.xlu0 %v387, 16
      %v420 = vpop.permute.xlu0 %419
      %423 = vrot.lane.b32.xlu0 %v384, 16
      %v424 = vpop.permute.xlu0 %423
      %425 = vrot.lane.b32.xlu0 %v386, 16
      %v426 = vpop.permute.xlu0 %425
      %vm427 = vcmask 130048
      %v428 = vsel %vm427, %v424, %v418
      %v429 = vsel %vm427, %v426, %v420
      %v434 = vsel %vm427, %v418, %v424
      %v435 = vsel %vm427, %v420, %v426
      %v436 = vperm.slane %v304, 1
      %v437 = vperm.slane %v305, 1
      %v438 = vmul.f32 %v434, %v436
      %v439 = vmul.f32 %v428, %v437
      %v440 = vmul.f32 %v435, %v436
      %v441 = vmul.f32 %v429, %v437
      %442 = vrot.lane.b32.xlu0 %v385, 15
      %v443 = vpop.permute.xlu0 %442
      %444 = vrot.lane.b32.xlu0 %v387, 15
      %v445 = vpop.permute.xlu0 %444
      %448 = vrot.lane.b32.xlu0 %v384, 15
      %v449 = vpop.permute.xlu0 %448
      %450 = vrot.lane.b32.xlu0 %v386, 15
      %v451 = vpop.permute.xlu0 %450
      %vm452 = vcmask 121856
      %v453 = vsel %vm452, %v449, %v443
      %v454 = vsel %vm452, %v451, %v445
      %v459 = vsel %vm452, %v443, %v449
      %v460 = vsel %vm452, %v445, %v451
      %v461 = vperm.slane %v304, 2
      %v462 = vperm.slane %v305, 2
      %v463 = vmul.f32 %v459, %v461
      %v464 = vmul.f32 %v453, %v462
      %v465 = vmul.f32 %v460, %v461
      %v466 = vmul.f32 %v454, %v462
      %467 = vrot.lane.b32.xlu0 %v385, 1
      %v468 = vpop.permute.xlu0 %467
      %469 = vrot.lane.b32.xlu0 %v387, 1
      %v470 = vpop.permute.xlu0 %469
      %473 = vrot.lane.b32.xlu0 %v384, 1
      %v474 = vpop.permute.xlu0 %473
      %475 = vrot.lane.b32.xlu0 %v386, 1
      %v476 = vpop.permute.xlu0 %475
      %vm477 = vcmask 7168
      %v478 = vsel %vm477, %v474, %v468
      %v479 = vsel %vm477, %v476, %v470
      %v484 = vsel %vm477, %v468, %v474
      %v485 = vsel %vm477, %v470, %v476
      %v486 = vperm.slane %v304, 3
      %v487 = vperm.slane %v305, 3
      %v488 = vmul.f32 %v484, %v486
      %v489 = vmul.f32 %v478, %v487
      %v490 = vmul.f32 %v485, %v486
      %v491 = vmul.f32 %v479, %v487
      %v492 = vperm.slane %v304, 4
      %v493 = vperm.slane %v305, 4
      %v494 = vmul.f32 %v384, %v492
      %v495 = vmul.f32 %v385, %v493
      %v496 = vmul.f32 %v386, %v492
      %v497 = vmul.f32 %v387, %v493
      %498 = vrot.lane.b32.xlu0 %v384, 127
      %v499 = vpop.permute.xlu0 %498
      %500 = vrot.lane.b32.xlu0 %v385, 127
      %v501 = vpop.permute.xlu0 %500
      %502 = vrot.lane.b32.xlu0 %v386, 127
      %v503 = vpop.permute.xlu0 %502
      %504 = vrot.lane.b32.xlu0 %v387, 127
      %v505 = vpop.permute.xlu0 %504
      %vm506 = vcmask 1039360
      %v507 = vsel %vm506, %v499, %v501
      %v508 = vsel %vm506, %v503, %v505
      %v515 = vsel %vm506, %v501, %v499
      %v516 = vsel %vm506, %v505, %v503
      %v517 = vperm.slane %v304, 5
      %v518 = vperm.slane %v305, 5
      %v519 = vmul.f32 %v507, %v517
      %v520 = vmul.f32 %v515, %v518
      %v521 = vmul.f32 %v508, %v517
      %v522 = vmul.f32 %v516, %v518
      %523 = vrot.lane.b32.xlu0 %v384, 113
      %v524 = vpop.permute.xlu0 %523
      %525 = vrot.lane.b32.xlu0 %v385, 113
      %v526 = vpop.permute.xlu0 %525
      %527 = vrot.lane.b32.xlu0 %v386, 113
      %v528 = vpop.permute.xlu0 %527
      %529 = vrot.lane.b32.xlu0 %v387, 113
      %v530 = vpop.permute.xlu0 %529
      %vm531 = vcmask 924672
      %v532 = vsel %vm531, %v524, %v526
      %v533 = vsel %vm531, %v528, %v530
      %v540 = vsel %vm531, %v526, %v524
      %v541 = vsel %vm531, %v530, %v528
      %v542 = vperm.slane %v304, 6
      %v543 = vperm.slane %v305, 6
      %v544 = vmul.f32 %v532, %v542
      %v545 = vmul.f32 %v540, %v543
      %v546 = vmul.f32 %v533, %v542
      %v547 = vmul.f32 %v541, %v543
      %548 = vrot.lane.b32.xlu0 %v384, 112
      %v549 = vpop.permute.xlu0 %548
      %550 = vrot.lane.b32.xlu0 %v385, 112
      %v551 = vpop.permute.xlu0 %550
      %552 = vrot.lane.b32.xlu0 %v386, 112
      %v553 = vpop.permute.xlu0 %552
      %554 = vrot.lane.b32.xlu0 %v387, 112
      %v555 = vpop.permute.xlu0 %554
      %vm556 = vcmask 916480
      %v557 = vsel %vm556, %v549, %v551
      %v558 = vsel %vm556, %v553, %v555
      %v565 = vsel %vm556, %v551, %v549
      %v566 = vsel %vm556, %v555, %v553
      %v567 = vperm.slane %v304, 7
      %v568 = vperm.slane %v305, 7
      %v569 = vmul.f32 %v557, %v567
      %v570 = vmul.f32 %v565, %v568
      %v571 = vmul.f32 %v558, %v567
      %v572 = vmul.f32 %v566, %v568
      %573 = vrot.lane.b32.xlu0 %v384, 111
      %v574 = vpop.permute.xlu0 %573
      %575 = vrot.lane.b32.xlu0 %v385, 111
      %v576 = vpop.permute.xlu0 %575
      %577 = vrot.lane.b32.xlu0 %v386, 111
      %v578 = vpop.permute.xlu0 %577
      %579 = vrot.lane.b32.xlu0 %v387, 111
      %v580 = vpop.permute.xlu0 %579
      %vm581 = vcmask 908288
      %v582 = vsel %vm581, %v574, %v576
      %v583 = vsel %vm581, %v578, %v580
      %v590 = vsel %vm581, %v576, %v574
      %v591 = vsel %vm581, %v580, %v578
      %v592 = vperm.slane %v306, 0
      %v593 = vperm.slane %v307, 0
      %v594 = vmul.f32 %v582, %v592
      %v595 = vmul.f32 %v590, %v593
      %v596 = vmul.f32 %v583, %v592
      %v597 = vmul.f32 %v591, %v593
      %599 = vst [vmem:[#allocation1] ss:$2 sm:$0xff] %v303
      %v600 = vld.sshfl [vmem:[#allocation1] sm:$0xff pattern:$0x75316420]
      %v601 = vld.sshfl [vmem:[#allocation1 + $0x8] sm:$0xff pattern:$0x75316420]
      %v603 = vsel %vm427, %v601, 0
      %605 = vmatpush.msra.mxu0 %v571
      %606 = vmatpush.msra.mxu0 %v569
      %607 = vmatpush.msra.mxu0 %v546
      %608 = vmatpush.msra.mxu0 %v544
      %609 = vmatpush.msra.mxu0 %v521
      %610 = vmatpush.msra.mxu0 %v519
      %611 = vmatpush.msra.mxu0 %v496
      %612 = vmatpush.msra.mxu0 %v494
      %613 = vmatpush.msra.mxu0 %v490
      %614 = vmatpush.msra.mxu0 %v488
      %615 = vmatpush.msra.mxu0 %v465
      %616 = vmatpush.msra.mxu0 %v463
      %617 = vmatpush.msra.mxu0 %v440
      %618 = vmatpush.msra.mxu0 %v438
      %619 = vmatpush.msra.mxu0 %v415
      %620 = vmatpush.msra.mxu0 %v413
      %621 = vmatmul.f32.gmra.mxu0 %v600
      %v622 = vpop.f32.mrf.mxu0
      %v623 = vadd.f32 0.0, %v622
      %624 = vdwg.mxu0
      %625 = vmatpush.msra.mxu0 0.0
      %626 = vmatpush.msra.mxu0 0.0
      %627 = vmatpush.msra.mxu0 0.0
      %628 = vmatpush.msra.mxu0 0.0
      %629 = vmatpush.msra.mxu0 0.0
      %630 = vmatpush.msra.mxu0 0.0
      %631 = vmatpush.msra.mxu0 0.0
      %632 = vmatpush.msra.mxu0 0.0
      %633 = vmatpush.msra.mxu0 0.0
      %634 = vmatpush.msra.mxu0 0.0
      %635 = vmatpush.msra.mxu0 0.0
      %636 = vmatpush.msra.mxu0 0.0
      %637 = vmatpush.msra.mxu0 0.0
      %638 = vmatpush.msra.mxu0 0.0
      %639 = vmatpush.msra.mxu0 %v596
      %640 = vmatpush.msra.mxu0 %v594
      %641 = vmatmul.f32.gmra.mxu0 %v603
      %v642 = vpop.f32.mrf.mxu0
      %v643 = vadd.f32 %v623, %v642
      %644 = vdwg.mxu0
      %645 = vmatpush.msra.mxu0 %v572
      %646 = vmatpush.msra.mxu0 %v570
      %647 = vmatpush.msra.mxu0 %v547
      %648 = vmatpush.msra.mxu0 %v545
      %649 = vmatpush.msra.mxu0 %v522
      %650 = vmatpush.msra.mxu0 %v520
      %651 = vmatpush.msra.mxu0 %v497
      %652 = vmatpush.msra.mxu0 %v495
      %653 = vmatpush.msra.mxu0 %v491
      %654 = vmatpush.msra.mxu0 %v489
      %655 = vmatpush.msra.mxu0 %v466
      %656 = vmatpush.msra.mxu0 %v464
      %657 = vmatpush.msra.mxu0 %v441
      %658 = vmatpush.msra.mxu0 %v439
      %659 = vmatpush.msra.mxu0 %v416
      %660 = vmatpush.msra.mxu0 %v414
      %661 = vmatmul.f32.gmra.mxu0 %v600
      %v662 = vpop.f32.mrf.mxu0
      %v663 = vadd.f32 0.0, %v662
      %664 = vdwg.mxu0
      %665 = vmatpush.msra.mxu0 0.0
      %666 = vmatpush.msra.mxu0 0.0
      %667 = vmatpush.msra.mxu0 0.0
      %668 = vmatpush.msra.mxu0 0.0
      %669 = vmatpush.msra.mxu0 0.0
      %670 = vmatpush.msra.mxu0 0.0
      %671 = vmatpush.msra.mxu0 0.0
      %672 = vmatpush.msra.mxu0 0.0
      %673 = vmatpush.msra.mxu0 0.0
      %674 = vmatpush.msra.mxu0 0.0
      %675 = vmatpush.msra.mxu0 0.0
      %676 = vmatpush.msra.mxu0 0.0
      %677 = vmatpush.msra.mxu0 0.0
      %678 = vmatpush.msra.mxu0 0.0
      %679 = vmatpush.msra.mxu0 %v597
      %680 = vmatpush.msra.mxu0 %v595
      %681 = vmatmul.f32.gmra.mxu0 %v603
      %v682 = vpop.f32.mrf.mxu0
      %v683 = vadd.f32 %v663, %v682
      %684 = vdwg.mxu0
      %686 = vst [vmem:[#allocation1] ss:$2 sm:$0xff] %v308
      %v687 = vld.sshfl [vmem:[#allocation1] sm:$0xff pattern:$0x75316420]
      %v688 = vld.sshfl [vmem:[#allocation1 + $0x8] sm:$0xff pattern:$0x75316420]
      %v693 = vrot.slane %v643, 4
      %v694 = vrot.slane %v683, 4
      %v697 = vsel %vm333, %v687, %v693
      %v698 = vsel %vm333, %v688, %v694
      %699 = vst [vmem:[%s278] sm:$0xff] %v697
      %700 = vst [vmem:[%s278 + $0x8] sm:$0xff] %v698
      %p701 = scmp.lt.s32.totalorder %s18, 1
      %s702 = scalar_select %p701, %s18, 1
      %s703 = smul.addr %s702, 2
      %s704 = smul.addr %s703, 8
      %s705 = scalar_lea.vmem %s7, %s704
      // Predicated region
      $region49: #{bottleneck_forward.1} parent=47 // pred_check
        %p706 = pneg %p188
      $region50: #{bottleneck_forward.1} parent=47 // pred_check_branch
        %708 = sbr.rel (%p706) target = $region52
      $region51: #{bottleneck_forward.1} parent=47 // pred_region
        _
      $region52: #{bottleneck_forward.1} parent=47 // pred_fallthru
        _
    $region48: #{bottleneck_forward.1} parent=5 // pred_fallthru
      _
    %p709 = scmp.le.s32.totalorder 2, %s13
    // Predicated region
    $region53: #{bottleneck_forward.1} parent=5 // pred_check
      %p710 = pneg %p709
    $region54: #{bottleneck_forward.1} parent=5 // pred_check_branch
      %712 = sbr.rel (%p710) target = $region56
    $region55: #{bottleneck_forward.1} parent=5 // pred_region
      %s713 = ssub.s32 %s13, 2
      // Predicated region
      $region57: #{bottleneck_forward.1} parent=55 // pred_check
        %p714 = pneg %p194
      $region58: #{bottleneck_forward.1} parent=55 // pred_check_branch
        %716 = sbr.rel (%p714) target = $region60
      $region59: #{bottleneck_forward.1} parent=55 // pred_region
        %p717 = scmp.lt.s32.totalorder %s19, 1
        %s718 = scalar_select %p717, %s19, 1
        %s719 = smul.addr %s718, 2
        %s720 = smul.addr %s719, 8
        %s721 = scalar_lea.vmem %s7, %s720
      $region60: #{bottleneck_forward.1} parent=55 // pred_fallthru
        _
    $region56: #{bottleneck_forward.1} parent=5 // pred_fallthru
      _
  $region6: #{bottleneck_forward.1} parent=0 // loop_footer
    %s17 = sadd.s32 1, %s13
  $region7: #{bottleneck_forward.1} parent=0 // loop_footer_branch
    %12 = sbr.rel target = $region3
  $region8: #{bottleneck_forward.1} parent=0 // loop_exit
    _

</llo_original>
